<compile_context>
chip_gen: v5e
topology: v5e:2x2
jax: 0.10.0
libtpu: 0.0.40
codegen_flags: <defaults>
</compile_context>

<pallas_src>
import functools

import numpy as np
import jax
import jax.numpy as jnp
from jax import lax
from jax.experimental import pallas as pl
from jax.experimental.pallas import tpu as pltpu


def fuse_downsample_weight(w_oihw, W):
    """Fold Conv2d(3x3, s=1, p=1, no bias) + PixelUnshuffle(2) + rearrange into
    one (4*W*Cin, (W//2)*4*Cmid) bf16 matrix.

    K (row) order: (p, w_in, cin), p in 0..3 = row offset inside the 4-row input
    band of an output row pair (input row = 2*h2 + p - 1); (w_in, cin) is the
    native lane order of an image row.
    N (col) order: (w2, c, i, j) with the PixelUnshuffle(2) channel index
    c*4 + i*2 + j fastest-varying after w2 — i.e. the final
    'b c h w -> b (h w) c' memory order.
    Runs once at weight-load time (numpy, outside jit).
    """
    w = np.asarray(w_oihw, np.float32)              # (Cmid, Cin, 3, 3) PyTorch OIHW
    Cmid, Cin = w.shape[0], w.shape[1]
    W2 = W // 2
    wf = np.zeros((4, W, Cin, W2, Cmid, 2, 2), np.float32)
    for i in range(2):                              # output row parity in 2x2 block
        for kh in range(3):
            p = i + kh                              # input row = 2*h2 + p - 1
            for j in range(2):                      # output col parity in 2x2 block
                for kw in range(3):
                    for w2 in range(W2):
                        w_in = 2 * w2 + j + kw - 1
                        if 0 <= w_in < W:           # w-halo: leave zeros
                            wf[p, w_in, :, w2, :, i, j] = w[:, :, kh, kw].T
    return jnp.asarray(wf.reshape(4 * W * Cin, W2 * 4 * Cmid), dtype=jnp.bfloat16)


def _down_kernel(x_ref, w_ref, o_ref):
    # x_ref: (B, H, W*Cin)      whole batch, native image layout, f32
    # w_ref: (4*W*Cin, W2*4*Cmid)  fused conv+unshuffle+rearrange weight, bf16
    # o_ref: (B, H2, W2*4*Cmid)    final memory order, lane-dense (8,128)-aligned
    B, H, WC = x_ref.shape
    H2 = H // 2
    Nout = w_ref.shape[1]

    # Even/odd row planes of the image, cast once to bf16 so every shuffle below
    # runs on packed vregs (MXU wants bf16 anyway).
    x = x_ref[...].astype(jnp.bfloat16).reshape(B, H2, 2, WC)
    xe = x[:, :, 0, :]                                       # rows 2*h2      (B,H2,WC)
    xo = x[:, :, 1, :]                                       # rows 2*h2 + 1  (B,H2,WC)

    # Shifted planes with per-batch zero halo rows (conv pad=1 at the h borders).
    zrow = jnp.zeros((B, 1, WC), jnp.bfloat16)
    xo_up = jnp.concatenate([zrow, xo[:, :H2 - 1, :]], axis=1)   # rows 2*h2 - 1
    xe_dn = jnp.concatenate([xe[:, 1:, :], zrow], axis=1)        # rows 2*h2 + 2

    # LHS row (b, h2) = the 4-row input band its 2x2 output blocks depend on,
    # kept in native (w, cin) lane order.  Lane concat at 128-aligned offsets
    # (WC = 128 here) -> no cross-lane movement; leading-dim reshape is free.
    lhs = jnp.concatenate([xo_up, xe, xo, xe_dn], axis=-1).reshape(B * H2, 4 * WC)

    # Single MXU matmul emits the final (PixelUnshuffle + rearrange) layout
    # directly; f32 accumulation.
    acc = jnp.dot(lhs, w_ref[...], preferred_element_type=jnp.float32)
    o_ref[...] = acc.reshape(B, H2, Nout).astype(o_ref.dtype)


@functools.partial(jax.jit, static_argnums=(1, 2))
def downsample_forward(x, H, W, wf):
    """x: (B, H*W, C); wf: pre-fused bf16 weight from fuse_downsample_weight.

    Returns (B, (H//2)*(W//2), 2*C), matching
    Conv2d(C, C//2, 3, s=1, p=1, bias=False) -> PixelUnshuffle(2) -> rearrange.
    """
    B, HW, C = x.shape
    assert HW == H * W, (HW, H, W)
    assert H % 2 == 0 and W % 2 == 0, "PixelUnshuffle(2) needs even H, W"
    H2, W2 = H // 2, W // 2
    K, Nout = wf.shape
    assert K == 4 * W * C and Nout % W2 == 0, (wf.shape, W, C)
    Nc = Nout // W2                                          # = 2*C final channels

    x_img = x.reshape(B, H, W * C)                           # free, contiguous

    out = pl.pallas_call(
        _down_kernel,
        out_shape=jax.ShapeDtypeStruct((B, H2, Nout), x.dtype),
        grid=(1,),                                           # single step, whole batch
        in_specs=[
            pl.BlockSpec((B, H, W * C), lambda i: (0, 0, 0)),
            pl.BlockSpec((K, Nout), lambda i: (0, 0)),
        ],
        out_specs=pl.BlockSpec((B, H2, Nout), lambda i: (0, 0, 0)),
        compiler_params=pltpu.CompilerParams(
            dimension_semantics=("arbitrary",)),
    )(x_img, wf)

    # (B, H2, W2*2C) -> (B, H2*W2, 2C): free reshape, already in final order.
    return out.reshape(B, H2 * W2, Nc)


def _reference(x, H, W, w_oihw):
    """Pure-JAX reference mimicking the PyTorch module exactly (f32 conv)."""
    B, HW, C = x.shape
    Cmid = w_oihw.shape[0]
    x_nchw = jnp.transpose(x.reshape(B, H, W, C), (0, 3, 1, 2))
    y = lax.conv_general_dilated(
        x_nchw, w_oihw, window_strides=(1, 1), padding=((1, 1), (1, 1)),
        dimension_numbers=("NCHW", "OIHW", "NCHW"))
    H2, W2 = H // 2, W // 2
    y = y.reshape(B, Cmid, H2, 2, W2, 2)
    y = jnp.transpose(y, (0, 1, 3, 5, 2, 4)).reshape(B, Cmid * 4, H2, W2)
    return jnp.transpose(y.reshape(B, Cmid * 4, H2 * W2), (0, 2, 1))


if __name__ == "__main__":
    B, H, W, n_feat = 2, 16, 16, 8
    key = jax.random.PRNGKey(0)
    kx, kw = jax.random.split(key)

    x = jax.random.normal(kx, (B, H * W, n_feat), dtype=jnp.float32)
    # Conv2d(n_feat, n_feat//2, 3, bias=False) weight, PyTorch OIHW layout.
    w = jax.random.normal(kw, (n_feat // 2, n_feat, 3, 3), dtype=jnp.float32) * 0.1

    # Weight fusion happens ONCE, at weight-load time (hoisted out of the jit).
    wf = fuse_downsample_weight(w, W)

    out = jax.block_until_ready(downsample_forward(x, H, W, wf))
    assert out.shape == (B, (H // 2) * (W // 2), 2 * n_feat), out.shape

    # Primary correctness gate: same module evaluated with bf16-rounded operands
    # (the kernel feeds bf16 to the MXU, accumulates in f32) -> tight tolerance.
    xq = x.astype(jnp.bfloat16).astype(jnp.float32)
    wq = w.astype(jnp.bfloat16).astype(jnp.float32)
    ref_q = _reference(xq, H, W, wq)
    err_q = float(jnp.max(jnp.abs(out - ref_q)))
    assert err_q < 2e-3, err_q

    # Sanity check against the full-f32 reference (bf16 operand rounding only).
    ref = _reference(x, H, W, w)
    err = float(jnp.max(jnp.abs(out - ref)))
    assert err < 1e-1, err

    print("KERNEL_OK")
</pallas_src>

<mosaic_0001>
module attributes {stable_mosaic.version = 11 : i64} {
  func.func @_down_kernel(%arg0: i32, %arg1: memref<2x16x128xf32, #tpu.memory_space<vmem>>, %arg2: memref<512x128xbf16, #tpu.memory_space<vmem>>, %arg3: memref<2x8x128xf32, #tpu.memory_space<vmem>>) attributes {dimension_semantics = [#tpu.dimension_semantics<arbitrary>], iteration_bounds = array<i64: 1>, scalar_prefetch = 0 : i64, scratch_operands = 0 : i64, tpu.core_type = #tpu.core_type<tc>, window_params = [{pipeline_mode = #tpu.pipeline_mode<synchronous>, transform_indices = @transform_0, window_bounds = array<i64: 2, 16, 128>}, {pipeline_mode = #tpu.pipeline_mode<synchronous>, transform_indices = @transform_1, window_bounds = array<i64: 512, 128>}, {pipeline_mode = #tpu.pipeline_mode<synchronous>, transform_indices = @transform_2, window_bounds = array<i64: 2, 8, 128>}]} {
    %c0 = arith.constant 0 : index
    %c0_0 = arith.constant 0 : index
    %c0_1 = arith.constant 0 : index
    %0 = vector.load %arg1[%c0, %c0_0, %c0_1] : memref<2x16x128xf32, #tpu.memory_space<vmem>>, vector<2x16x128xf32>
    %1 = arith.truncf %0 : vector<2x16x128xf32> to vector<2x16x128xbf16>
    %2 = vector.shape_cast %1 : vector<2x16x128xbf16> to vector<2x8x2x128xbf16>
    %3 = vector.extract_strided_slice %2 {offsets = [0, 0, 0, 0], sizes = [2, 8, 1, 128], strides = [1, 1, 1, 1]} : vector<2x8x2x128xbf16> to vector<2x8x1x128xbf16>
    %4 = vector.shape_cast %3 : vector<2x8x1x128xbf16> to vector<2x8x128xbf16>
    %5 = vector.extract_strided_slice %2 {offsets = [0, 0, 1, 0], sizes = [2, 8, 1, 128], strides = [1, 1, 1, 1]} : vector<2x8x2x128xbf16> to vector<2x8x1x128xbf16>
    %6 = vector.shape_cast %5 : vector<2x8x1x128xbf16> to vector<2x8x128xbf16>
    %cst = arith.constant 0.000000e+00 : bf16
    %7 = vector.broadcast %cst : bf16 to vector<2x1x128xbf16>
    %8 = vector.extract_strided_slice %6 {offsets = [0, 0, 0], sizes = [2, 7, 128], strides = [1, 1, 1]} : vector<2x8x128xbf16> to vector<2x7x128xbf16>
    %9 = tpu.concatenate %7, %8 in 1 : vector<2x1x128xbf16>, vector<2x7x128xbf16> -> vector<2x8x128xbf16>
    %10 = vector.extract_strided_slice %4 {offsets = [0, 1, 0], sizes = [2, 7, 128], strides = [1, 1, 1]} : vector<2x8x128xbf16> to vector<2x7x128xbf16>
    %11 = tpu.concatenate %10, %7 in 1 : vector<2x7x128xbf16>, vector<2x1x128xbf16> -> vector<2x8x128xbf16>
    %12 = tpu.concatenate %9, %4, %6, %11 in 2 : vector<2x8x128xbf16>, vector<2x8x128xbf16>, vector<2x8x128xbf16>, vector<2x8x128xbf16> -> vector<2x8x512xbf16>
    %13 = vector.shape_cast %12 : vector<2x8x512xbf16> to vector<16x512xbf16>
    %c0_2 = arith.constant 0 : index
    %c0_3 = arith.constant 0 : index
    %14 = vector.load %arg2[%c0_2, %c0_3] : memref<512x128xbf16, #tpu.memory_space<vmem>>, vector<512x128xbf16>
    %cst_4 = arith.constant dense<0.000000e+00> : vector<16x128xf32>
    %15 = tpu.matmul %13, %14, %cst_4 {dimension_numbers = #tpu.dot_dimension_numbers<[1], [0], [0], [1], [0, 0, 1, 1], [], []>} : vector<16x512xbf16>, vector<512x128xbf16>, vector<16x128xf32> -> vector<16x128xf32>
    %16 = vector.shape_cast %15 : vector<16x128xf32> to vector<2x8x128xf32>
    %c0_5 = arith.constant 0 : index
    %c0_6 = arith.constant 0 : index
    %c0_7 = arith.constant 0 : index
    %17 = vector.load %arg3[%c0_5, %c0_6, %c0_7] : memref<2x8x128xf32, #tpu.memory_space<vmem>>, vector<2x8x128xf32>
    tpu.vector_store %arg3[%c0_5, %c0_6, %c0_7], %16 {strides = array<i32>} : memref<2x8x128xf32, #tpu.memory_space<vmem>>, vector<2x8x128xf32>,
    return
  }
  func.func @transform_0(%arg0: i32) -> (i32, i32, i32) {
    %c0_i32 = arith.constant 0 : i32
    %c0_i32_0 = arith.constant 0 : i32
    %c0_i32_1 = arith.constant 0 : i32
    %c0_i32_2 = arith.constant 0 : i32
    return %c0_i32, %c0_i32_0, %c0_i32_1 : i32, i32, i32
  }
  func.func @transform_1(%arg0: i32) -> (i32, i32) {
    %c0_i32 = arith.constant 0 : i32
    %c0_i32_0 = arith.constant 0 : i32
    %c0_i32_1 = arith.constant 0 : i32
    return %c0_i32, %c0_i32_0 : i32, i32
  }
  func.func @transform_2(%arg0: i32) -> (i32, i32, i32) {
    %c0_i32 = arith.constant 0 : i32
    %c0_i32_0 = arith.constant 0 : i32
    %c0_i32_1 = arith.constant 0 : i32
    %c0_i32_2 = arith.constant 0 : i32
    return %c0_i32, %c0_i32_0, %c0_i32_1 : i32, i32, i32
  }
}

</mosaic_0001>

<llo_original>
// kernel: downsample_forward.1
$region0: #{downsample_forward.1}
  #allocation0 [shape = 'u32[]', space=smem, size = 0x4, offset = 0x4, fixed_abs, tag = 'smem constant byte address 0x4 - core index']
  #allocation1 [shape = 'u32[72,128]{1,0:T(1,128)}', space=vmem, size = 0x9000, scoped, tag = 'internal scratch']
  %s0 = inlined_call_operand.vmem [shape: f32[2,16,128], index: 0, kind: input, shape index: {}]
  %s1 = inlined_call_operand.vmem [shape: bf16[512,128], index: 1, kind: input, shape index: {}]
  %s2 = inlined_call_operand.vmem [shape: f32[2,8,128], index: 2, kind: output, shape index: {}]
  %s3 = sld [smem:[#allocation0]]
  $region18: #{downsample_forward.1} parent=0
    _
  %s5 = ssub.s32 1, %s3
  %s6 = scalar_select 0, %s5, %s3
  // Predicated region
  $region2: #{downsample_forward.1} parent=0 // pred_check
    _
  $region3: #{downsample_forward.1} parent=0 // pred_check_branch
    %8 = sbr.rel (0) target = $region5
  $region4: #{downsample_forward.1} parent=0 // pred_region
    _
  $region5: #{downsample_forward.1} parent=0 // pred_fallthru
    _
  // Predicated region
  $region6: #{downsample_forward.1} parent=0 // pred_check
    _
  $region7: #{downsample_forward.1} parent=0 // pred_check_branch
    %10 = sbr.rel (0) target = $region9
  $region8: #{downsample_forward.1} parent=0 // pred_region
    _
  $region9: #{downsample_forward.1} parent=0 // pred_fallthru
    _
  %v12 = vld [vmem:[%s0] sm:$0xff]
  %v13 = vld [vmem:[%s0 + $0x8] sm:$0xff]
  %v14 = vld [vmem:[%s0 + $0x10] sm:$0xff]
  %v15 = vld [vmem:[%s0 + $0x18] sm:$0xff]
  %v16 = vpack.c.bf16 %v12, %v12
  %v17 = vpack.c.bf16 %v13, %v13
  %v18 = vpack.c.bf16 %v14, %v14
  %v19 = vpack.c.bf16 %v15, %v15
  %v24 = vrot.slane %v16, 3
  %v25 = vrot.slane %v17, 3
  %v26 = vrot.slane %v18, 3
  %v27 = vrot.slane %v19, 3
  %vm28 = vcmask 1040384
  %v31 = vsel %vm28, %v16, %v24
  %vm32 = vcmask 1041409
  %v33 = vsel %vm32, %v16, %v24
  %v35 = vrot.slane %v33, 1
  %vm36 = vcmask 1042434
  %v37 = vsel %vm36, %v16, %v24
  %v39 = vrot.slane %v37, 2
  %vm40 = vcmask 1043459
  %v41 = vsel %vm40, %v16, %v24
  %v43 = vrot.slane %v41, 3
  %v46 = vsel %vm28, %v17, %v25
  %v47 = vsel %vm32, %v17, %v25
  %v49 = vrot.slane %v47, 1
  %v50 = vsel %vm36, %v17, %v25
  %v52 = vrot.slane %v50, 2
  %v53 = vsel %vm40, %v17, %v25
  %v55 = vrot.slane %v53, 3
  %v58 = vsel %vm28, %v18, %v26
  %v59 = vsel %vm32, %v18, %v26
  %v61 = vrot.slane %v59, 1
  %v62 = vsel %vm36, %v18, %v26
  %v64 = vrot.slane %v62, 2
  %v65 = vsel %vm40, %v18, %v26
  %v67 = vrot.slane %v65, 3
  %v70 = vsel %vm28, %v19, %v27
  %v71 = vsel %vm32, %v19, %v27
  %v73 = vrot.slane %v71, 1
  %v74 = vsel %vm36, %v19, %v27
  %v76 = vrot.slane %v74, 2
  %v77 = vsel %vm40, %v19, %v27
  %v79 = vrot.slane %v77, 3
  %80 = vst [vmem:[#allocation1] ss:$9 sm:$0xff] %v31
  %v81 = vld [vmem:[#allocation1] sm:$0xff]
  %84 = vst [vmem:[#allocation1] ss:$9 sm:$0xff] %v35
  %v85 = vld [vmem:[#allocation1] sm:$0xff]
  %88 = vst [vmem:[#allocation1] ss:$9 sm:$0xff] %v39
  %v89 = vld [vmem:[#allocation1] sm:$0xff]
  %92 = vst [vmem:[#allocation1] ss:$9 sm:$0xff] %v43
  %v93 = vld [vmem:[#allocation1] sm:$0xff]
  %95 = vst [vmem:[#allocation1] ss:$9 sm:$0xff] %v46
  %v96 = vld [vmem:[#allocation1] sm:$0xff]
  %99 = vst [vmem:[#allocation1] ss:$9 sm:$0xff] %v49
  %v100 = vld [vmem:[#allocation1] sm:$0xff]
  %103 = vst [vmem:[#allocation1] ss:$9 sm:$0xff] %v52
  %v104 = vld [vmem:[#allocation1] sm:$0xff]
  %106 = vst [vmem:[#allocation1] ss:$9 sm:$0xff] %v58
  %v107 = vld [vmem:[#allocation1] sm:$0xff]
  %110 = vst [vmem:[#allocation1] ss:$9 sm:$0xff] %v61
  %v111 = vld [vmem:[#allocation1] sm:$0xff]
  %114 = vst [vmem:[#allocation1] ss:$9 sm:$0xff] %v64
  %v115 = vld [vmem:[#allocation1] sm:$0xff]
  %118 = vst [vmem:[#allocation1] ss:$9 sm:$0xff] %v67
  %v119 = vld [vmem:[#allocation1] sm:$0xff]
  %121 = vst [vmem:[#allocation1] ss:$9 sm:$0xff] %v70
  %v122 = vld [vmem:[#allocation1] sm:$0xff]
  %125 = vst [vmem:[#allocation1] ss:$9 sm:$0xff] %v73
  %v126 = vld [vmem:[#allocation1] sm:$0xff]
  %129 = vst [vmem:[#allocation1] ss:$9 sm:$0xff] %v76
  %v130 = vld [vmem:[#allocation1] sm:$0xff]
  %v132 = vunpack.c.l.b16 %v81
  %v133 = vunpack.c.l.b16 %v85
  %v134 = vunpack.c.l.b16 %v89
  %v135 = vunpack.c.l.b16 %v93
  %v136 = vunpack.c.l.b16 %v96
  %v137 = vunpack.c.l.b16 %v100
  %v138 = vunpack.c.l.b16 %v104
  %v139 = vunpack.c.l.b16 %v107
  %v140 = vunpack.c.l.b16 %v111
  %v141 = vunpack.c.l.b16 %v115
  %v142 = vunpack.c.l.b16 %v119
  %v143 = vunpack.c.l.b16 %v122
  %v144 = vunpack.c.l.b16 %v126
  %v145 = vunpack.c.l.b16 %v130
  %v146 = vrot.slane %v133, 7
  %v147 = vsel %vm36, %v146, %v132
  %v148 = vrot.slane %v134, 6
  %v149 = vsel %vm40, %v148, %v147
  %v150 = vrot.slane %v135, 5
  %vm151 = vcmask 1044484
  %v152 = vsel %vm151, %v150, %v149
  %v153 = vrot.slane %v136, 4
  %vm154 = vcmask 1045509
  %v155 = vsel %vm154, %v153, %v152
  %v156 = vrot.slane %v137, 3
  %vm157 = vcmask 1046534
  %v158 = vsel %vm157, %v156, %v155
  %v159 = vrot.slane %v138, 2
  %vm160 = vcmask 1047559
  %v161 = vsel %vm160, %v159, %v158
  %v162 = vrot.slane %v140, 7
  %v163 = vsel %vm36, %v162, %v139
  %v164 = vrot.slane %v141, 6
  %v165 = vsel %vm40, %v164, %v163
  %v166 = vrot.slane %v142, 5
  %v167 = vsel %vm151, %v166, %v165
  %v168 = vrot.slane %v143, 4
  %v169 = vsel %vm154, %v168, %v167
  %v170 = vrot.slane %v144, 3
  %v171 = vsel %vm157, %v170, %v169
  %v172 = vrot.slane %v145, 2
  %v173 = vsel %vm160, %v172, %v171
  %v174 = vpack.c.b16 %v161, %v161
  %v175 = vpack.c.b16 %v173, %v173
  %vm178 = vcmask 1040384
  %vm179 = vsmask.f32 256
  %vm180 = vmand %vm178, %vm179
  %v181 = vsel %vm180, 0, %v174
  %v182 = vsel %vm180, 0, %v175
  %183 = vst [vmem:[#allocation1] ss:$9 sm:$0xff] %v35
  %v184 = vld [vmem:[#allocation1] sm:$0xff]
  %186 = vst [vmem:[#allocation1] ss:$9 sm:$0xff] %v39
  %v187 = vld [vmem:[#allocation1] sm:$0xff]
  %189 = vst [vmem:[#allocation1] ss:$9 sm:$0xff] %v43
  %v190 = vld [vmem:[#allocation1] sm:$0xff]
  %192 = vst [vmem:[#allocation1] ss:$9 sm:$0xff] %v46
  %v193 = vld [vmem:[#allocation1] sm:$0xff]
  %195 = vst [vmem:[#allocation1] ss:$9 sm:$0xff] %v49
  %v196 = vld [vmem:[#allocation1] sm:$0xff]
  %198 = vst [vmem:[#allocation1] ss:$9 sm:$0xff] %v52
  %v199 = vld [vmem:[#allocation1] sm:$0xff]
  %202 = vst [vmem:[#allocation1] ss:$9 sm:$0xff] %v55
  %v203 = vld [vmem:[#allocation1] sm:$0xff]
  %205 = vst [vmem:[#allocation1] ss:$9 sm:$0xff] %v61
  %v206 = vld [vmem:[#allocation1] sm:$0xff]
  %208 = vst [vmem:[#allocation1] ss:$9 sm:$0xff] %v64
  %v209 = vld [vmem:[#allocation1] sm:$0xff]
  %211 = vst [vmem:[#allocation1] ss:$9 sm:$0xff] %v67
  %v212 = vld [vmem:[#allocation1] sm:$0xff]
  %214 = vst [vmem:[#allocation1] ss:$9 sm:$0xff] %v70
  %v215 = vld [vmem:[#allocation1] sm:$0xff]
  %217 = vst [vmem:[#allocation1] ss:$9 sm:$0xff] %v73
  %v218 = vld [vmem:[#allocation1] sm:$0xff]
  %220 = vst [vmem:[#allocation1] ss:$9 sm:$0xff] %v76
  %v221 = vld [vmem:[#allocation1] sm:$0xff]
  %224 = vst [vmem:[#allocation1] ss:$9 sm:$0xff] %v79
  %v225 = vld [vmem:[#allocation1] sm:$0xff]
  %v227 = vunpack.c.l.b16 %v184
  %v228 = vunpack.c.l.b16 %v187
  %v229 = vunpack.c.l.b16 %v190
  %v230 = vunpack.c.l.b16 %v193
  %v231 = vunpack.c.l.b16 %v196
  %v232 = vunpack.c.l.b16 %v199
  %v233 = vunpack.c.l.b16 %v203
  %v234 = vunpack.c.l.b16 %v206
  %v235 = vunpack.c.l.b16 %v209
  %v236 = vunpack.c.l.b16 %v212
  %v237 = vunpack.c.l.b16 %v215
  %v238 = vunpack.c.l.b16 %v218
  %v239 = vunpack.c.l.b16 %v221
  %v240 = vunpack.c.l.b16 %v225
  %v241 = vrot.slane %v228, 7
  %v242 = vsel %vm32, %v241, %v227
  %v243 = vrot.slane %v229, 6
  %v244 = vsel %vm36, %v243, %v242
  %v245 = vrot.slane %v230, 5
  %v246 = vsel %vm40, %v245, %v244
  %v247 = vrot.slane %v231, 4
  %v248 = vsel %vm151, %v247, %v246
  %v249 = vrot.slane %v232, 3
  %v250 = vsel %vm154, %v249, %v248
  %v251 = vrot.slane %v233, 2
  %v252 = vsel %vm157, %v251, %v250
  %v253 = vrot.slane %v235, 7
  %v254 = vsel %vm32, %v253, %v234
  %v255 = vrot.slane %v236, 6
  %v256 = vsel %vm36, %v255, %v254
  %v257 = vrot.slane %v237, 5
  %v258 = vsel %vm40, %v257, %v256
  %v259 = vrot.slane %v238, 4
  %v260 = vsel %vm151, %v259, %v258
  %v261 = vrot.slane %v239, 3
  %v262 = vsel %vm154, %v261, %v260
  %v263 = vrot.slane %v240, 2
  %v264 = vsel %vm157, %v263, %v262
  %v265 = vpack.c.b16 %v252, %v252
  %v266 = vpack.c.b16 %v264, %v264
  %vm269 = vcmask 1043456
  %vm270 = vsmask.f32 3328
  %vm271 = vmand %vm269, %vm270
  %v272 = vsel %vm271, %v265, 0
  %v273 = vsel %vm271, %v266, 0
  %274 = vst [vmem:[#allocation1] ss:$9 sm:$0xff] %v31
  %v275 = vld [vmem:[#allocation1] sm:$0xff]
  %277 = vst [vmem:[#allocation1] ss:$9 sm:$0xff] %v35
  %v278 = vld [vmem:[#allocation1] sm:$0xff]
  %280 = vst [vmem:[#allocation1] ss:$9 sm:$0xff] %v39
  %v281 = vld [vmem:[#allocation1] sm:$0xff]
  %283 = vst [vmem:[#allocation1] ss:$9 sm:$0xff] %v43
  %v284 = vld [vmem:[#allocation1] sm:$0xff]
  %286 = vst [vmem:[#allocation1] ss:$9 sm:$0xff] %v46
  %v287 = vld [vmem:[#allocation1] sm:$0xff]
  %289 = vst [vmem:[#allocation1] ss:$9 sm:$0xff] %v49
  %v290 = vld [vmem:[#allocation1] sm:$0xff]
  %292 = vst [vmem:[#allocation1] ss:$9 sm:$0xff] %v52
  %v293 = vld [vmem:[#allocation1] sm:$0xff]
  %295 = vst [vmem:[#allocation1] ss:$9 sm:$0xff] %v55
  %v296 = vld [vmem:[#allocation1] sm:$0xff]
  %298 = vst [vmem:[#allocation1] ss:$9 sm:$0xff] %v58
  %v299 = vld [vmem:[#allocation1] sm:$0xff]
  %301 = vst [vmem:[#allocation1] ss:$9 sm:$0xff] %v61
  %v302 = vld [vmem:[#allocation1] sm:$0xff]
  %304 = vst [vmem:[#allocation1] ss:$9 sm:$0xff] %v64
  %v305 = vld [vmem:[#allocation1] sm:$0xff]
  %307 = vst [vmem:[#allocation1] ss:$9 sm:$0xff] %v67
  %v308 = vld [vmem:[#allocation1] sm:$0xff]
  %310 = vst [vmem:[#allocation1] ss:$9 sm:$0xff] %v70
  %v311 = vld [vmem:[#allocation1] sm:$0xff]
  %313 = vst [vmem:[#allocation1] ss:$9 sm:$0xff] %v73
  %v314 = vld [vmem:[#allocation1] sm:$0xff]
  %316 = vst [vmem:[#allocation1] ss:$9 sm:$0xff] %v76
  %v317 = vld [vmem:[#allocation1] sm:$0xff]
  %319 = vst [vmem:[#allocation1] ss:$9 sm:$0xff] %v79
  %v320 = vld [vmem:[#allocation1] sm:$0xff]
  %v322 = vunpack.c.l.b16 %v275
  %v323 = vunpack.c.l.b16 %v278
  %v324 = vunpack.c.l.b16 %v281
  %v325 = vunpack.c.l.b16 %v284
  %v326 = vunpack.c.l.b16 %v287
  %v327 = vunpack.c.l.b16 %v290
  %v328 = vunpack.c.l.b16 %v293
  %v329 = vunpack.c.l.b16 %v296
  %v330 = vunpack.c.l.b16 %v299
  %v331 = vunpack.c.l.b16 %v302
  %v332 = vunpack.c.l.b16 %v305
  %v333 = vunpack.c.l.b16 %v308
  %v334 = vunpack.c.l.b16 %v311
  %v335 = vunpack.c.l.b16 %v314
  %v336 = vunpack.c.l.b16 %v317
  %v337 = vunpack.c.l.b16 %v320
  %v338 = vrot.slane %v323, 7
  %v339 = vsel %vm32, %v338, %v322
  %v340 = vrot.slane %v324, 6
  %v341 = vsel %vm36, %v340, %v339
  %v342 = vrot.slane %v325, 5
  %v343 = vsel %vm40, %v342, %v341
  %v344 = vrot.slane %v326, 4
  %v345 = vsel %vm151, %v344, %v343
  %v346 = vrot.slane %v327, 3
  %v347 = vsel %vm154, %v346, %v345
  %v348 = vrot.slane %v328, 2
  %v349 = vsel %vm157, %v348, %v347
  %v350 = vrot.slane %v329, 1
  %v351 = vsel %vm160, %v350, %v349
  %v352 = vrot.slane %v331, 7
  %v353 = vsel %vm32, %v352, %v330
  %v354 = vrot.slane %v332, 6
  %v355 = vsel %vm36, %v354, %v353
  %v356 = vrot.slane %v333, 5
  %v357 = vsel %vm40, %v356, %v355
  %v358 = vrot.slane %v334, 4
  %v359 = vsel %vm151, %v358, %v357
  %v360 = vrot.slane %v335, 3
  %v361 = vsel %vm154, %v360, %v359
  %v362 = vrot.slane %v336, 2
  %v363 = vsel %vm157, %v362, %v361
  %v364 = vrot.slane %v337, 1
  %v365 = vsel %vm160, %v364, %v363
  %366 = vst [vmem:[#allocation1] ss:$9 sm:$0xff] %v31
  %v367 = vld [vmem:[#allocation1] sm:$0xff]
  %369 = vst [vmem:[#allocation1] ss:$9 sm:$0xff] %v35
  %v370 = vld [vmem:[#allocation1] sm:$0xff]
  %372 = vst [vmem:[#allocation1] ss:$9 sm:$0xff] %v39
  %v373 = vld [vmem:[#allocation1] sm:$0xff]
  %375 = vst [vmem:[#allocation1] ss:$9 sm:$0xff] %v43
  %v376 = vld [vmem:[#allocation1] sm:$0xff]
  %378 = vst [vmem:[#allocation1] ss:$9 sm:$0xff] %v46
  %v379 = vld [vmem:[#allocation1] sm:$0xff]
  %381 = vst [vmem:[#allocation1] ss:$9 sm:$0xff] %v49
  %v382 = vld [vmem:[#allocation1] sm:$0xff]
  %384 = vst [vmem:[#allocation1] ss:$9 sm:$0xff] %v52
  %v385 = vld [vmem:[#allocation1] sm:$0xff]
  %387 = vst [vmem:[#allocation1] ss:$9 sm:$0xff] %v55
  %v388 = vld [vmem:[#allocation1] sm:$0xff]
  %390 = vst [vmem:[#allocation1] ss:$9 sm:$0xff] %v58
  %v391 = vld [vmem:[#allocation1] sm:$0xff]
  %393 = vst [vmem:[#allocation1] ss:$9 sm:$0xff] %v61
  %v394 = vld [vmem:[#allocation1] sm:$0xff]
  %396 = vst [vmem:[#allocation1] ss:$9 sm:$0xff] %v64
  %v397 = vld [vmem:[#allocation1] sm:$0xff]
  %399 = vst [vmem:[#allocation1] ss:$9 sm:$0xff] %v67
  %v400 = vld [vmem:[#allocation1] sm:$0xff]
  %402 = vst [vmem:[#allocation1] ss:$9 sm:$0xff] %v70
  %v403 = vld [vmem:[#allocation1] sm:$0xff]
  %405 = vst [vmem:[#allocation1] ss:$9 sm:$0xff] %v73
  %v406 = vld [vmem:[#allocation1] sm:$0xff]
  %408 = vst [vmem:[#allocation1] ss:$9 sm:$0xff] %v76
  %v409 = vld [vmem:[#allocation1] sm:$0xff]
  %411 = vst [vmem:[#allocation1] ss:$9 sm:$0xff] %v79
  %v412 = vld [vmem:[#allocation1] sm:$0xff]
  %v414 = vunpack.c.l.b16 %v367
  %v415 = vunpack.c.l.b16 %v370
  %v416 = vunpack.c.l.b16 %v373
  %v417 = vunpack.c.l.b16 %v376
  %v418 = vunpack.c.l.b16 %v379
  %v419 = vunpack.c.l.b16 %v382
  %v420 = vunpack.c.l.b16 %v385
  %v421 = vunpack.c.l.b16 %v388
  %v422 = vunpack.c.l.b16 %v391
  %v423 = vunpack.c.l.b16 %v394
  %v424 = vunpack.c.l.b16 %v397
  %v425 = vunpack.c.l.b16 %v400
  %v426 = vunpack.c.l.b16 %v403
  %v427 = vunpack.c.l.b16 %v406
  %v428 = vunpack.c.l.b16 %v409
  %v429 = vunpack.c.l.b16 %v412
  %v430 = vrot.slane %v414, 1
  %v431 = vsel %vm32, %v415, %v430
  %v432 = vrot.slane %v416, 7
  %v433 = vsel %vm36, %v432, %v431
  %v434 = vrot.slane %v417, 6
  %v435 = vsel %vm40, %v434, %v433
  %v436 = vrot.slane %v418, 5
  %v437 = vsel %vm151, %v436, %v435
  %v438 = vrot.slane %v419, 4
  %v439 = vsel %vm154, %v438, %v437
  %v440 = vrot.slane %v420, 3
  %v441 = vsel %vm157, %v440, %v439
  %v442 = vrot.slane %v421, 2
  %v443 = vsel %vm160, %v442, %v441
  %v444 = vrot.slane %v422, 1
  %v445 = vsel %vm32, %v423, %v444
  %v446 = vrot.slane %v424, 7
  %v447 = vsel %vm36, %v446, %v445
  %v448 = vrot.slane %v425, 6
  %v449 = vsel %vm40, %v448, %v447
  %v450 = vrot.slane %v426, 5
  %v451 = vsel %vm151, %v450, %v449
  %v452 = vrot.slane %v427, 4
  %v453 = vsel %vm154, %v452, %v451
  %v454 = vrot.slane %v428, 3
  %v455 = vsel %vm157, %v454, %v453
  %v456 = vrot.slane %v429, 2
  %v457 = vsel %vm160, %v456, %v455
  %v462 = vunpack.c.l.b16 %v181
  %v463 = vunpack.c.l.b16 %v272
  %v464 = vunpack.c.l.b16 %v182
  %v465 = vunpack.c.l.b16 %v273
  %v466 = vld [vmem:[%s1] sm:$0xf]
  %v467 = vld [vmem:[%s1 + $0x4] sm:$0xf]
  %v468 = vld [vmem:[%s1 + $0x8] sm:$0xf]
  %v469 = vld [vmem:[%s1 + $0xc] sm:$0xf]
  %v470 = vld [vmem:[%s1 + $0x10] sm:$0xf]
  %v471 = vld [vmem:[%s1 + $0x14] sm:$0xf]
  %v472 = vld [vmem:[%s1 + $0x18] sm:$0xf]
  %v473 = vld [vmem:[%s1 + $0x1c] sm:$0xf]
  %v474 = vld [vmem:[%s1 + $0x20] sm:$0xf]
  %v475 = vld [vmem:[%s1 + $0x24] sm:$0xf]
  %v476 = vld [vmem:[%s1 + $0x28] sm:$0xf]
  %v477 = vld [vmem:[%s1 + $0x2c] sm:$0xf]
  %v478 = vld [vmem:[%s1 + $0x30] sm:$0xf]
  %v479 = vld [vmem:[%s1 + $0x34] sm:$0xf]
  %v480 = vld [vmem:[%s1 + $0x38] sm:$0xf]
  %v481 = vld [vmem:[%s1 + $0x3c] sm:$0xf]
  %v482 = vld [vmem:[%s1 + $0x40] sm:$0xf]
  %v483 = vld [vmem:[%s1 + $0x44] sm:$0xf]
  %v484 = vld [vmem:[%s1 + $0x48] sm:$0xf]
  %v485 = vld [vmem:[%s1 + $0x4c] sm:$0xf]
  %v486 = vld [vmem:[%s1 + $0x50] sm:$0xf]
  %v487 = vld [vmem:[%s1 + $0x54] sm:$0xf]
  %v488 = vld [vmem:[%s1 + $0x58] sm:$0xf]
  %v489 = vld [vmem:[%s1 + $0x5c] sm:$0xf]
  %v490 = vld [vmem:[%s1 + $0x60] sm:$0xf]
  %v491 = vld [vmem:[%s1 + $0x64] sm:$0xf]
  %v492 = vld [vmem:[%s1 + $0x68] sm:$0xf]
  %v493 = vld [vmem:[%s1 + $0x6c] sm:$0xf]
  %v494 = vld [vmem:[%s1 + $0x70] sm:$0xf]
  %v495 = vld [vmem:[%s1 + $0x74] sm:$0xf]
  %v496 = vld [vmem:[%s1 + $0x78] sm:$0xf]
  %v497 = vld [vmem:[%s1 + $0x7c] sm:$0xf]
  %v498 = vld [vmem:[%s1 + $0x80] sm:$0xf]
  %v499 = vld [vmem:[%s1 + $0x84] sm:$0xf]
  %v500 = vld [vmem:[%s1 + $0x88] sm:$0xf]
  %v501 = vld [vmem:[%s1 + $0x8c] sm:$0xf]
  %v502 = vld [vmem:[%s1 + $0x90] sm:$0xf]
  %v503 = vld [vmem:[%s1 + $0x94] sm:$0xf]
  %v504 = vld [vmem:[%s1 + $0x98] sm:$0xf]
  %v505 = vld [vmem:[%s1 + $0x9c] sm:$0xf]
  %v506 = vld [vmem:[%s1 + $0xa0] sm:$0xf]
  %v507 = vld [vmem:[%s1 + $0xa4] sm:$0xf]
  %v508 = vld [vmem:[%s1 + $0xa8] sm:$0xf]
  %v509 = vld [vmem:[%s1 + $0xac] sm:$0xf]
  %v510 = vld [vmem:[%s1 + $0xb0] sm:$0xf]
  %v511 = vld [vmem:[%s1 + $0xb4] sm:$0xf]
  %v512 = vld [vmem:[%s1 + $0xb8] sm:$0xf]
  %v513 = vld [vmem:[%s1 + $0xbc] sm:$0xf]
  %v514 = vld [vmem:[%s1 + $0xc0] sm:$0xf]
  %v515 = vld [vmem:[%s1 + $0xc4] sm:$0xf]
  %v516 = vld [vmem:[%s1 + $0xc8] sm:$0xf]
  %v517 = vld [vmem:[%s1 + $0xcc] sm:$0xf]
  %v518 = vld [vmem:[%s1 + $0xd0] sm:$0xf]
  %v519 = vld [vmem:[%s1 + $0xd4] sm:$0xf]
  %v520 = vld [vmem:[%s1 + $0xd8] sm:$0xf]
  %v521 = vld [vmem:[%s1 + $0xdc] sm:$0xf]
  %v522 = vld [vmem:[%s1 + $0xe0] sm:$0xf]
  %v523 = vld [vmem:[%s1 + $0xe4] sm:$0xf]
  %v524 = vld [vmem:[%s1 + $0xe8] sm:$0xf]
  %v525 = vld [vmem:[%s1 + $0xec] sm:$0xf]
  %v526 = vld [vmem:[%s1 + $0xf0] sm:$0xf]
  %v527 = vld [vmem:[%s1 + $0xf4] sm:$0xf]
  %v528 = vld [vmem:[%s1 + $0xf8] sm:$0xf]
  %v529 = vld [vmem:[%s1 + $0xfc] sm:$0xf]
  %v530 = vpack.c.b16 %v464, %v462
  %v531 = vpack.c.b16 %v365, %v351
  %v532 = vpack.c.b16 %v457, %v443
  %v533 = vpack.c.b16 %v465, %v463
  %v602 = vunpack.c.l.b16 %v466
  %v603 = vunpack.c.l.b16 %v467
  %v604 = vunpack.c.l.b16 %v468
  %v605 = vunpack.c.l.b16 %v469
  %v606 = vunpack.c.l.b16 %v470
  %v607 = vunpack.c.l.b16 %v471
  %v608 = vunpack.c.l.b16 %v472
  %v609 = vunpack.c.l.b16 %v473
  %v610 = vunpack.c.l.b16 %v474
  %v611 = vunpack.c.l.b16 %v475
  %v612 = vunpack.c.l.b16 %v476
  %v613 = vunpack.c.l.b16 %v477
  %v614 = vunpack.c.l.b16 %v478
  %v615 = vunpack.c.l.b16 %v479
  %v616 = vunpack.c.l.b16 %v480
  %v617 = vunpack.c.l.b16 %v481
  %v618 = vunpack.c.l.b16 %v482
  %v619 = vunpack.c.l.b16 %v483
  %v620 = vunpack.c.l.b16 %v484
  %v621 = vunpack.c.l.b16 %v485
  %v622 = vunpack.c.l.b16 %v486
  %v623 = vunpack.c.l.b16 %v487
  %v624 = vunpack.c.l.b16 %v488
  %v625 = vunpack.c.l.b16 %v489
  %v626 = vunpack.c.l.b16 %v490
  %v627 = vunpack.c.l.b16 %v491
  %v628 = vunpack.c.l.b16 %v492
  %v629 = vunpack.c.l.b16 %v493
  %v630 = vunpack.c.l.b16 %v494
  %v631 = vunpack.c.l.b16 %v495
  %v632 = vunpack.c.l.b16 %v496
  %v633 = vunpack.c.l.b16 %v497
  %v634 = vunpack.c.l.b16 %v498
  %v635 = vunpack.c.l.b16 %v499
  %v636 = vunpack.c.l.b16 %v500
  %v637 = vunpack.c.l.b16 %v501
  %v638 = vunpack.c.l.b16 %v502
  %v639 = vunpack.c.l.b16 %v503
  %v640 = vunpack.c.l.b16 %v504
  %v641 = vunpack.c.l.b16 %v505
  %v642 = vunpack.c.l.b16 %v506
  %v643 = vunpack.c.l.b16 %v507
  %v644 = vunpack.c.l.b16 %v508
  %v645 = vunpack.c.l.b16 %v509
  %v646 = vunpack.c.l.b16 %v510
  %v647 = vunpack.c.l.b16 %v511
  %v648 = vunpack.c.l.b16 %v512
  %v649 = vunpack.c.l.b16 %v513
  %v650 = vunpack.c.l.b16 %v514
  %v651 = vunpack.c.l.b16 %v515
  %v652 = vunpack.c.l.b16 %v516
  %v653 = vunpack.c.l.b16 %v517
  %v654 = vunpack.c.l.b16 %v518
  %v655 = vunpack.c.l.b16 %v519
  %v656 = vunpack.c.l.b16 %v520
  %v657 = vunpack.c.l.b16 %v521
  %v658 = vunpack.c.l.b16 %v522
  %v659 = vunpack.c.l.b16 %v523
  %v660 = vunpack.c.l.b16 %v524
  %v661 = vunpack.c.l.b16 %v525
  %v662 = vunpack.c.l.b16 %v526
  %v663 = vunpack.c.l.b16 %v527
  %v664 = vunpack.c.l.b16 %v528
  %v665 = vunpack.c.l.b16 %v529
  %v666 = vpack.c.b16 %v603, %v602
  %v667 = vpack.c.b16 %v605, %v604
  %v668 = vpack.c.b16 %v607, %v606
  %v669 = vpack.c.b16 %v609, %v608
  %v670 = vpack.c.b16 %v611, %v610
  %v671 = vpack.c.b16 %v613, %v612
  %v672 = vpack.c.b16 %v615, %v614
  %v673 = vpack.c.b16 %v617, %v616
  %v674 = vpack.c.b16 %v619, %v618
  %v675 = vpack.c.b16 %v621, %v620
  %v676 = vpack.c.b16 %v623, %v622
  %v677 = vpack.c.b16 %v625, %v624
  %v678 = vpack.c.b16 %v627, %v626
  %v679 = vpack.c.b16 %v629, %v628
  %v680 = vpack.c.b16 %v631, %v630
  %v681 = vpack.c.b16 %v633, %v632
  %v682 = vpack.c.b16 %v635, %v634
  %v683 = vpack.c.b16 %v637, %v636
  %v684 = vpack.c.b16 %v639, %v638
  %v685 = vpack.c.b16 %v641, %v640
  %v686 = vpack.c.b16 %v643, %v642
  %v687 = vpack.c.b16 %v645, %v644
  %v688 = vpack.c.b16 %v647, %v646
  %v689 = vpack.c.b16 %v649, %v648
  %v690 = vpack.c.b16 %v651, %v650
  %v691 = vpack.c.b16 %v653, %v652
  %v692 = vpack.c.b16 %v655, %v654
  %v693 = vpack.c.b16 %v657, %v656
  %v694 = vpack.c.b16 %v659, %v658
  %v695 = vpack.c.b16 %v661, %v660
  %v696 = vpack.c.b16 %v663, %v662
  %v697 = vpack.c.b16 %v665, %v664
  %730 = vmatpush.bf16.msra.mxu0 %v673
  %731 = vmatpush.bf16.msra.mxu0 %v672
  %732 = vmatpush.bf16.msra.mxu0 %v671
  %733 = vmatpush.bf16.msra.mxu0 %v670
  %734 = vmatpush.bf16.msra.mxu0 %v669
  %735 = vmatpush.bf16.msra.mxu0 %v668
  %736 = vmatpush.bf16.msra.mxu0 %v667
  %737 = vmatpush.bf16.msra.mxu0 %v666
  %738 = vmatmul.bf16.gmra.mxu0 %v530
  %v739 = vpop.f32.mrf.mxu0
  %v740 = vadd.f32 0.0, %v739
  %v741 = vpop.f32.mrf.mxu0
  %v742 = vadd.f32 0.0, %v741
  %743 = vdwg.mxu0
  %744 = vmatpush.bf16.msra.mxu0 %v681
  %745 = vmatpush.bf16.msra.mxu0 %v680
  %746 = vmatpush.bf16.msra.mxu0 %v679
  %747 = vmatpush.bf16.msra.mxu0 %v678
  %748 = vmatpush.bf16.msra.mxu0 %v677
  %749 = vmatpush.bf16.msra.mxu0 %v676
  %750 = vmatpush.bf16.msra.mxu0 %v675
  %751 = vmatpush.bf16.msra.mxu0 %v674
  %752 = vmatmul.bf16.gmra.mxu0 %v531
  %v753 = vpop.f32.mrf.mxu0
  %v754 = vadd.f32 %v740, %v753
  %v755 = vpop.f32.mrf.mxu0
  %v756 = vadd.f32 %v742, %v755
  %757 = vdwg.mxu0
  %758 = vmatpush.bf16.msra.mxu0 %v689
  %759 = vmatpush.bf16.msra.mxu0 %v688
  %760 = vmatpush.bf16.msra.mxu0 %v687
  %761 = vmatpush.bf16.msra.mxu0 %v686
  %762 = vmatpush.bf16.msra.mxu0 %v685
  %763 = vmatpush.bf16.msra.mxu0 %v684
  %764 = vmatpush.bf16.msra.mxu0 %v683
  %765 = vmatpush.bf16.msra.mxu0 %v682
  %766 = vmatmul.bf16.gmra.mxu0 %v532
  %v767 = vpop.f32.mrf.mxu0
  %v768 = vadd.f32 %v754, %v767
  %v769 = vpop.f32.mrf.mxu0
  %v770 = vadd.f32 %v756, %v769
  %771 = vdwg.mxu0
  %772 = vmatpush.bf16.msra.mxu0 %v697
  %773 = vmatpush.bf16.msra.mxu0 %v696
  %774 = vmatpush.bf16.msra.mxu0 %v695
  %775 = vmatpush.bf16.msra.mxu0 %v694
  %776 = vmatpush.bf16.msra.mxu0 %v693
  %777 = vmatpush.bf16.msra.mxu0 %v692
  %778 = vmatpush.bf16.msra.mxu0 %v691
  %779 = vmatpush.bf16.msra.mxu0 %v690
  %780 = vmatmul.bf16.gmra.mxu0 %v533
  %v781 = vpop.f32.mrf.mxu0
  %v782 = vadd.f32 %v768, %v781
  %v783 = vpop.f32.mrf.mxu0
  %v784 = vadd.f32 %v770, %v783
  %785 = vdwg.mxu0
  %786 = vst [vmem:[%s2] sm:$0xff] %v782
  %787 = vst [vmem:[%s2 + $0x8] sm:$0xff] %v784
  // Predicated region
  $region10: #{downsample_forward.1} parent=0 // pred_check
    _
  $region11: #{downsample_forward.1} parent=0 // pred_check_branch
    %789 = sbr.rel (0) target = $region13
  $region12: #{downsample_forward.1} parent=0 // pred_region
    _
  $region13: #{downsample_forward.1} parent=0 // pred_fallthru
    _
  // Predicated region
  $region14: #{downsample_forward.1} parent=0 // pred_check
    _
  $region15: #{downsample_forward.1} parent=0 // pred_check_branch
    %791 = sbr.rel (0) target = $region17
  $region16: #{downsample_forward.1} parent=0 // pred_region
    _
  $region17: #{downsample_forward.1} parent=0 // pred_fallthru
    _

</llo_original>
